<compile_context>
chip_gen: v7x
topology: tpu7x:2x2x1
jax: 0.10.0
libtpu: 0.0.40
codegen_flags: <defaults>
</compile_context>

<pallas_src>
import jax
import jax.numpy as jnp
from jax.experimental import pallas as pl
from jax.experimental.pallas import tpu as pltpu

_HIDDEN = 256
_LANE = 128


def _round_up(x, m):
    return ((x + m - 1) // m) * m


def _leaky_relu(v):
    return jnp.where(v > 0, v, 0.2 * v)


def _muscle_kernel(jta_ref, tau_ref,
                   w0a_ref, w0b_ref, b0_ref,
                   w1_ref, b1_ref,
                   w2_ref, b2_ref,
                   w3_ref, b3_ref,
                   out_ref):
    # Layer 0 as two MXU dots (no in-kernel lane concat); 1/std already folded
    # into w0a/w0b.  bf16 at the MXU boundary, f32 accumulation, f32 VPU math.
    jta = jta_ref[...].astype(jnp.bfloat16)          # (TB, M_dofs)
    tau = tau_ref[...].astype(jnp.bfloat16)          # (TB, D)
    h = (jnp.dot(jta, w0a_ref[...], preferred_element_type=jnp.float32)
         + jnp.dot(tau, w0b_ref[...], preferred_element_type=jnp.float32)
         + b0_ref[...])
    h = _leaky_relu(h)
    h = _leaky_relu(
        jnp.dot(h.astype(jnp.bfloat16), w1_ref[...],
                preferred_element_type=jnp.float32) + b1_ref[...])
    h = _leaky_relu(
        jnp.dot(h.astype(jnp.bfloat16), w2_ref[...],
                preferred_element_type=jnp.float32) + b2_ref[...])
    # Output layer (padded to a lane-dense width): Linear -> tanh -> relu.
    o = jnp.dot(h.astype(jnp.bfloat16), w3_ref[...],
                preferred_element_type=jnp.float32) + b3_ref[...]
    out_ref[...] = jnp.maximum(jnp.tanh(o), 0.0).astype(out_ref.dtype)


def muscle_nn_forward(reduced_JtA, tau, prepared, *, block_b=512):
    """Forward pass.  `prepared` comes from prepare_params()."""
    B, M = reduced_JtA.shape
    D = tau.shape[1]
    H = _HIDDEN
    out_pad = prepared["w3"].shape[1]
    num_muscles = prepared["num_muscles"]

    # Batch tile: multiple of 8 sublanes, capped by block_b; pad batch to it.
    tb = _round_up(min(block_b, _round_up(B, 8)), 8)
    Bp = _round_up(B, tb)
    if Bp != B:
        reduced_JtA = jnp.pad(reduced_JtA, ((0, Bp - B), (0, 0)))
        tau = jnp.pad(tau, ((0, Bp - B), (0, 0)))
    grid = (Bp // tb,)

    const2 = lambda i: (0, 0)
    in_specs = [
        pl.BlockSpec((tb, M), lambda i: (i, 0)),      # streamed activations
        pl.BlockSpec((tb, D), lambda i: (i, 0)),
        pl.BlockSpec((M, H), const2),                 # resident weights
        pl.BlockSpec((D, H), const2),
        pl.BlockSpec((1, H), const2),
        pl.BlockSpec((H, H), const2),
        pl.BlockSpec((1, H), const2),
        pl.BlockSpec((H, H), const2),
        pl.BlockSpec((1, H), const2),
        pl.BlockSpec((H, out_pad), const2),
        pl.BlockSpec((1, out_pad), const2),
    ]

    flops = 2 * Bp * ((M + D) * H + 2 * H * H + H * out_pad)
    bytes_accessed = (
        ((M + D) * H + 2 * H * H + H * out_pad) * 2        # bf16 weights
        + (3 * H + out_pad) * 4                            # f32 biases
        + Bp * (M + D) * 4 + Bp * out_pad * 4)             # activations in/out

    out = pl.pallas_call(
        _muscle_kernel,
        out_shape=jax.ShapeDtypeStruct((Bp, out_pad), jnp.float32),
        grid=grid,
        in_specs=in_specs,
        out_specs=pl.BlockSpec((tb, out_pad), lambda i: (i, 0)),
        compiler_params=pltpu.CompilerParams(
            dimension_semantics=("parallel",)),
        cost_estimate=pl.CostEstimate(
            flops=flops,
            transcendentals=Bp * out_pad,
            bytes_accessed=bytes_accessed),
    )(reduced_JtA, tau,
      prepared["w0a"], prepared["w0b"], prepared["b0"],
      prepared["w1"], prepared["b1"],
      prepared["w2"], prepared["b2"],
      prepared["w3"], prepared["b3"])

    return out[:B, :num_muscles]


def init_params(key, num_total_muscle_related_dofs, num_dofs, num_muscles,
                sizes=(256, 256, 256)):
    """Deterministic xavier-uniform weights, zero biases, std = 200 (f32)."""
    dims = [num_total_muscle_related_dofs + num_dofs] + list(sizes) + [num_muscles]
    params = {
        "std_muscle_tau": jnp.ones((num_total_muscle_related_dofs,),
                                   jnp.float32) * 200.0,
        "std_tau": jnp.ones((num_dofs,), jnp.float32) * 200.0,
    }
    for i in range(len(dims) - 1):
        key, sub = jax.random.split(key)
        fan_in, fan_out = dims[i], dims[i + 1]
        bound = (6.0 / (fan_in + fan_out)) ** 0.5   # xavier_uniform_, gain=1
        params[f"w{i}"] = jax.random.uniform(
            sub, (fan_in, fan_out), jnp.float32, minval=-bound, maxval=bound)
        params[f"b{i}"] = jnp.zeros((fan_out,), jnp.float32)
    return params


def prepare_params(params, num_total_muscle_related_dofs):
    """One-time, off-hot-path prep: fold 1/std into layer-0 weights, split the
    layer-0 matmul, cast weights to bf16, pad the output layer to 128 lanes."""
    M = num_total_muscle_related_dofs
    H = params["w1"].shape[0]
    num_muscles = params["w3"].shape[1]
    out_pad = _round_up(num_muscles, _LANE)

    inv_m = (1.0 / params["std_muscle_tau"]).astype(jnp.float32)
    inv_t = (1.0 / params["std_tau"]).astype(jnp.float32)
    w0 = params["w0"]
    w3p = jnp.zeros((H, out_pad), jnp.float32).at[:, :num_muscles].set(params["w3"])
    b3p = jnp.zeros((1, out_pad), jnp.float32).at[:, :num_muscles].set(params["b3"])
    return {
        "w0a": (w0[:M, :] * inv_m[:, None]).astype(jnp.bfloat16),
        "w0b": (w0[M:, :] * inv_t[:, None]).astype(jnp.bfloat16),
        "b0": params["b0"].reshape(1, -1).astype(jnp.float32),
        "w1": params["w1"].astype(jnp.bfloat16),
        "b1": params["b1"].reshape(1, -1).astype(jnp.float32),
        "w2": params["w2"].astype(jnp.bfloat16),
        "b2": params["b2"].reshape(1, -1).astype(jnp.float32),
        "w3": w3p.astype(jnp.bfloat16),
        "b3": b3p,
        "num_muscles": num_muscles,
    }


def reference_forward(reduced_JtA, tau, params):
    """Plain-JAX f32 reference of the PyTorch forward (sanity checking)."""
    x = jnp.concatenate(
        [reduced_JtA / params["std_muscle_tau"], tau / params["std_tau"]], axis=-1)
    for i in range(3):
        x = x @ params[f"w{i}"] + params[f"b{i}"]
        x = jnp.where(x > 0, x, 0.2 * x)
    x = x @ params["w3"] + params["b3"]
    return jnp.maximum(jnp.tanh(x), 0.0)


if __name__ == "__main__":
    # Small shapes consistent with the module's forward.
    num_total_muscle_related_dofs = 64
    num_dofs = 32
    num_muscles = 40
    batch = 8

    key = jax.random.PRNGKey(0)
    kp, k1, k2 = jax.random.split(key, 3)
    params = init_params(kp, num_total_muscle_related_dofs, num_dofs, num_muscles)
    prepared = prepare_params(params, num_total_muscle_related_dofs)

    # Input torques of realistic magnitude (std normalization is /200).
    reduced_JtA = jax.random.normal(
        k1, (batch, num_total_muscle_related_dofs), jnp.float32) * 100.0
    tau = jax.random.normal(k2, (batch, num_dofs), jnp.float32) * 100.0

    out = muscle_nn_forward(reduced_JtA, tau, prepared)
    out = jax.block_until_ready(out)
    ref = reference_forward(reduced_JtA, tau, params)
    assert out.shape == (batch, num_muscles)
    # Weights/activations hit the MXU in bf16 -> looser tolerance vs f32 ref.
    assert jnp.allclose(out, ref, atol=2e-2, rtol=2e-2), float(
        jnp.max(jnp.abs(out - ref)))

    # Exercise the batch-padding path (non-multiple-of-8 batch).
    out5 = jax.block_until_ready(
        muscle_nn_forward(reduced_JtA[:5], tau[:5], prepared))
    assert out5.shape == (5, num_muscles)
    assert jnp.allclose(out5, ref[:5], atol=2e-2, rtol=2e-2)

    print("KERNEL_OK")
</pallas_src>

<mosaic_0001>
module attributes {stable_mosaic.version = 11 : i64} {
  func.func @_muscle_kernel(%arg0: i32, %arg1: memref<8x64xf32, #tpu.memory_space<vmem>>, %arg2: memref<8x32xf32, #tpu.memory_space<vmem>>, %arg3: memref<64x256xbf16, #tpu.memory_space<vmem>>, %arg4: memref<32x256xbf16, #tpu.memory_space<vmem>>, %arg5: memref<1x256xf32, #tpu.memory_space<vmem>>, %arg6: memref<256x256xbf16, #tpu.memory_space<vmem>>, %arg7: memref<1x256xf32, #tpu.memory_space<vmem>>, %arg8: memref<256x256xbf16, #tpu.memory_space<vmem>>, %arg9: memref<1x256xf32, #tpu.memory_space<vmem>>, %arg10: memref<256x128xbf16, #tpu.memory_space<vmem>>, %arg11: memref<1x128xf32, #tpu.memory_space<vmem>>, %arg12: memref<8x128xf32, #tpu.memory_space<vmem>>) attributes {dimension_semantics = [#tpu.dimension_semantics<parallel>], iteration_bounds = array<i64: 1>, scalar_prefetch = 0 : i64, scratch_operands = 0 : i64, tpu.core_type = #tpu.core_type<tc>, window_params = [{transform_indices = @transform_0, window_bounds = array<i64: 8, 64>}, {transform_indices = @transform_1, window_bounds = array<i64: 8, 32>}, {pipeline_mode = #tpu.pipeline_mode<synchronous>, transform_indices = @transform_2, window_bounds = array<i64: 64, 256>}, {pipeline_mode = #tpu.pipeline_mode<synchronous>, transform_indices = @transform_3, window_bounds = array<i64: 32, 256>}, {pipeline_mode = #tpu.pipeline_mode<synchronous>, transform_indices = @transform_4, window_bounds = array<i64: 1, 256>}, {pipeline_mode = #tpu.pipeline_mode<synchronous>, transform_indices = @transform_5, window_bounds = array<i64: 256, 256>}, {pipeline_mode = #tpu.pipeline_mode<synchronous>, transform_indices = @transform_6, window_bounds = array<i64: 1, 256>}, {pipeline_mode = #tpu.pipeline_mode<synchronous>, transform_indices = @transform_7, window_bounds = array<i64: 256, 256>}, {pipeline_mode = #tpu.pipeline_mode<synchronous>, transform_indices = @transform_8, window_bounds = array<i64: 1, 256>}, {pipeline_mode = #tpu.pipeline_mode<synchronous>, transform_indices = @transform_9, window_bounds = array<i64: 256, 128>}, {pipeline_mode = #tpu.pipeline_mode<synchronous>, transform_indices = @transform_10, window_bounds = array<i64: 1, 128>}, {transform_indices = @transform_11, window_bounds = array<i64: 8, 128>}]} {
    %c0 = arith.constant 0 : index
    %c0_0 = arith.constant 0 : index
    %0 = vector.load %arg1[%c0, %c0_0] : memref<8x64xf32, #tpu.memory_space<vmem>>, vector<8x64xf32>
    %1 = arith.truncf %0 : vector<8x64xf32> to vector<8x64xbf16>
    %c0_1 = arith.constant 0 : index
    %c0_2 = arith.constant 0 : index
    %2 = vector.load %arg2[%c0_1, %c0_2] : memref<8x32xf32, #tpu.memory_space<vmem>>, vector<8x32xf32>
    %3 = arith.truncf %2 : vector<8x32xf32> to vector<8x32xbf16>
    %c0_3 = arith.constant 0 : index
    %c0_4 = arith.constant 0 : index
    %4 = vector.load %arg3[%c0_3, %c0_4] : memref<64x256xbf16, #tpu.memory_space<vmem>>, vector<64x256xbf16>
    %cst = arith.constant dense<0.000000e+00> : vector<8x256xf32>
    %5 = tpu.matmul %1, %4, %cst {dimension_numbers = #tpu.dot_dimension_numbers<[1], [0], [0], [1], [0, 0, 1, 1], [], []>} : vector<8x64xbf16>, vector<64x256xbf16>, vector<8x256xf32> -> vector<8x256xf32>
    %c0_5 = arith.constant 0 : index
    %c0_6 = arith.constant 0 : index
    %6 = vector.load %arg4[%c0_5, %c0_6] : memref<32x256xbf16, #tpu.memory_space<vmem>>, vector<32x256xbf16>
    %cst_7 = arith.constant dense<0.000000e+00> : vector<8x256xf32>
    %7 = tpu.matmul %3, %6, %cst_7 {dimension_numbers = #tpu.dot_dimension_numbers<[1], [0], [0], [1], [0, 0, 1, 1], [], []>} : vector<8x32xbf16>, vector<32x256xbf16>, vector<8x256xf32> -> vector<8x256xf32>
    %8 = arith.addf %5, %7 : vector<8x256xf32>
    %c0_8 = arith.constant 0 : index
    %c0_9 = arith.constant 0 : index
    %9 = vector.load %arg5[%c0_8, %c0_9] : memref<1x256xf32, #tpu.memory_space<vmem>>, vector<1x256xf32>
    %10 = vector.broadcast %9 : vector<1x256xf32> to vector<8x256xf32>
    %11 = arith.addf %8, %10 : vector<8x256xf32>
    %cst_10 = arith.constant 0.000000e+00 : f32
    %12 = vector.broadcast %cst_10 : f32 to vector<8x256xf32>
    %13 = arith.cmpf ogt, %11, %12 : vector<8x256xf32>
    %cst_11 = arith.constant 2.000000e-01 : f32
    %14 = vector.broadcast %cst_11 : f32 to vector<8x256xf32>
    %15 = arith.mulf %14, %11 : vector<8x256xf32>
    %16 = arith.select %13, %11, %15 : vector<8x256xi1>, vector<8x256xf32>
    %17 = arith.truncf %16 : vector<8x256xf32> to vector<8x256xbf16>
    %c0_12 = arith.constant 0 : index
    %c0_13 = arith.constant 0 : index
    %18 = vector.load %arg6[%c0_12, %c0_13] : memref<256x256xbf16, #tpu.memory_space<vmem>>, vector<256x256xbf16>
    %cst_14 = arith.constant dense<0.000000e+00> : vector<8x256xf32>
    %19 = tpu.matmul %17, %18, %cst_14 {dimension_numbers = #tpu.dot_dimension_numbers<[1], [0], [0], [1], [0, 0, 1, 1], [], []>} : vector<8x256xbf16>, vector<256x256xbf16>, vector<8x256xf32> -> vector<8x256xf32>
    %c0_15 = arith.constant 0 : index
    %c0_16 = arith.constant 0 : index
    %20 = vector.load %arg7[%c0_15, %c0_16] : memref<1x256xf32, #tpu.memory_space<vmem>>, vector<1x256xf32>
    %21 = vector.broadcast %20 : vector<1x256xf32> to vector<8x256xf32>
    %22 = arith.addf %19, %21 : vector<8x256xf32>
    %cst_17 = arith.constant 0.000000e+00 : f32
    %23 = vector.broadcast %cst_17 : f32 to vector<8x256xf32>
    %24 = arith.cmpf ogt, %22, %23 : vector<8x256xf32>
    %cst_18 = arith.constant 2.000000e-01 : f32
    %25 = vector.broadcast %cst_18 : f32 to vector<8x256xf32>
    %26 = arith.mulf %25, %22 : vector<8x256xf32>
    %27 = arith.select %24, %22, %26 : vector<8x256xi1>, vector<8x256xf32>
    %28 = arith.truncf %27 : vector<8x256xf32> to vector<8x256xbf16>
    %c0_19 = arith.constant 0 : index
    %c0_20 = arith.constant 0 : index
    %29 = vector.load %arg8[%c0_19, %c0_20] : memref<256x256xbf16, #tpu.memory_space<vmem>>, vector<256x256xbf16>
    %cst_21 = arith.constant dense<0.000000e+00> : vector<8x256xf32>
    %30 = tpu.matmul %28, %29, %cst_21 {dimension_numbers = #tpu.dot_dimension_numbers<[1], [0], [0], [1], [0, 0, 1, 1], [], []>} : vector<8x256xbf16>, vector<256x256xbf16>, vector<8x256xf32> -> vector<8x256xf32>
    %c0_22 = arith.constant 0 : index
    %c0_23 = arith.constant 0 : index
    %31 = vector.load %arg9[%c0_22, %c0_23] : memref<1x256xf32, #tpu.memory_space<vmem>>, vector<1x256xf32>
    %32 = vector.broadcast %31 : vector<1x256xf32> to vector<8x256xf32>
    %33 = arith.addf %30, %32 : vector<8x256xf32>
    %cst_24 = arith.constant 0.000000e+00 : f32
    %34 = vector.broadcast %cst_24 : f32 to vector<8x256xf32>
    %35 = arith.cmpf ogt, %33, %34 : vector<8x256xf32>
    %cst_25 = arith.constant 2.000000e-01 : f32
    %36 = vector.broadcast %cst_25 : f32 to vector<8x256xf32>
    %37 = arith.mulf %36, %33 : vector<8x256xf32>
    %38 = arith.select %35, %33, %37 : vector<8x256xi1>, vector<8x256xf32>
    %39 = arith.truncf %38 : vector<8x256xf32> to vector<8x256xbf16>
    %c0_26 = arith.constant 0 : index
    %c0_27 = arith.constant 0 : index
    %40 = vector.load %arg10[%c0_26, %c0_27] : memref<256x128xbf16, #tpu.memory_space<vmem>>, vector<256x128xbf16>
    %cst_28 = arith.constant dense<0.000000e+00> : vector<8x128xf32>
    %41 = tpu.matmul %39, %40, %cst_28 {dimension_numbers = #tpu.dot_dimension_numbers<[1], [0], [0], [1], [0, 0, 1, 1], [], []>} : vector<8x256xbf16>, vector<256x128xbf16>, vector<8x128xf32> -> vector<8x128xf32>
    %c0_29 = arith.constant 0 : index
    %c0_30 = arith.constant 0 : index
    %42 = vector.load %arg11[%c0_29, %c0_30] : memref<1x128xf32, #tpu.memory_space<vmem>>, vector<1x128xf32>
    %43 = vector.broadcast %42 : vector<1x128xf32> to vector<8x128xf32>
    %44 = arith.addf %41, %43 : vector<8x128xf32>
    %45 = math.tanh %44 : vector<8x128xf32>
    %cst_31 = arith.constant 0.000000e+00 : f32
    %46 = vector.broadcast %cst_31 : f32 to vector<8x128xf32>
    %47 = arith.maximumf %45, %46 : vector<8x128xf32>
    %c0_32 = arith.constant 0 : index
    %c0_33 = arith.constant 0 : index
    %48 = vector.load %arg12[%c0_32, %c0_33] : memref<8x128xf32, #tpu.memory_space<vmem>>, vector<8x128xf32>
    tpu.vector_store %arg12[%c0_32, %c0_33], %47 {strides = array<i32>} : memref<8x128xf32, #tpu.memory_space<vmem>>, vector<8x128xf32>,
    return
  }
  func.func @transform_0(%arg0: i32) -> (i32, i32) {
    %c0_i32 = arith.constant 0 : i32
    %c0_i32_0 = arith.constant 0 : i32
    return %arg0, %c0_i32 : i32, i32
  }
  func.func @transform_1(%arg0: i32) -> (i32, i32) {
    %c0_i32 = arith.constant 0 : i32
    %c0_i32_0 = arith.constant 0 : i32
    return %arg0, %c0_i32 : i32, i32
  }
  func.func @transform_2(%arg0: i32) -> (i32, i32) {
    %c0_i32 = arith.constant 0 : i32
    %c0_i32_0 = arith.constant 0 : i32
    %c0_i32_1 = arith.constant 0 : i32
    return %c0_i32, %c0_i32_0 : i32, i32
  }
  func.func @transform_3(%arg0: i32) -> (i32, i32) {
    %c0_i32 = arith.constant 0 : i32
    %c0_i32_0 = arith.constant 0 : i32
    %c0_i32_1 = arith.constant 0 : i32
    return %c0_i32, %c0_i32_0 : i32, i32
  }
  func.func @transform_4(%arg0: i32) -> (i32, i32) {
    %c0_i32 = arith.constant 0 : i32
    %c0_i32_0 = arith.constant 0 : i32
    %c0_i32_1 = arith.constant 0 : i32
    return %c0_i32, %c0_i32_0 : i32, i32
  }
  func.func @transform_5(%arg0: i32) -> (i32, i32) {
    %c0_i32 = arith.constant 0 : i32
    %c0_i32_0 = arith.constant 0 : i32
    %c0_i32_1 = arith.constant 0 : i32
    return %c0_i32, %c0_i32_0 : i32, i32
  }
  func.func @transform_6(%arg0: i32) -> (i32, i32) {
    %c0_i32 = arith.constant 0 : i32
    %c0_i32_0 = arith.constant 0 : i32
    %c0_i32_1 = arith.constant 0 : i32
    return %c0_i32, %c0_i32_0 : i32, i32
  }
  func.func @transform_7(%arg0: i32) -> (i32, i32) {
    %c0_i32 = arith.constant 0 : i32
    %c0_i32_0 = arith.constant 0 : i32
    %c0_i32_1 = arith.constant 0 : i32
    return %c0_i32, %c0_i32_0 : i32, i32
  }
  func.func @transform_8(%arg0: i32) -> (i32, i32) {
    %c0_i32 = arith.constant 0 : i32
    %c0_i32_0 = arith.constant 0 : i32
    %c0_i32_1 = arith.constant 0 : i32
    return %c0_i32, %c0_i32_0 : i32, i32
  }
  func.func @transform_9(%arg0: i32) -> (i32, i32) {
    %c0_i32 = arith.constant 0 : i32
    %c0_i32_0 = arith.constant 0 : i32
    %c0_i32_1 = arith.constant 0 : i32
    return %c0_i32, %c0_i32_0 : i32, i32
  }
  func.func @transform_10(%arg0: i32) -> (i32, i32) {
    %c0_i32 = arith.constant 0 : i32
    %c0_i32_0 = arith.constant 0 : i32
    %c0_i32_1 = arith.constant 0 : i32
    return %c0_i32, %c0_i32_0 : i32, i32
  }
  func.func @transform_11(%arg0: i32) -> (i32, i32) {
    %c0_i32 = arith.constant 0 : i32
    %c0_i32_0 = arith.constant 0 : i32
    return %arg0, %c0_i32 : i32, i32
  }
}

</mosaic_0001>

<llo_original>
// kernel: tpu_custom_call.1
$region0: #{tpu_custom_call.1}
  #allocation0 [shape = 'u32[]', space=smem, size = 0x4, offset = 0x4, fixed_abs, tag = 'smem constant byte address 0x4 - core index']
  #allocation1 [shape = 'u32[144,128]{1,0:T(1,128)}', space=vmem, size = 0x12000, scoped, tag = 'internal scratch']
  %s0 = inlined_call_operand.hbm [shape: f32[8,64], index: 0, kind: input, shape index: {}]
  %s1 = inlined_call_operand.hbm [shape: f32[8,32], index: 1, kind: input, shape index: {}]
  %s2 = inlined_call_operand.hbm [shape: bf16[64,256], index: 2, kind: input, shape index: {}]
  %s3 = inlined_call_operand.hbm [shape: bf16[32,256], index: 3, kind: input, shape index: {}]
  %s4 = inlined_call_operand.vmem [shape: f32[1,256], index: 4, kind: input, shape index: {}]
  %s5 = inlined_call_operand.hbm [shape: bf16[256,256], index: 5, kind: input, shape index: {}]
  %s6 = inlined_call_operand.vmem [shape: f32[1,256], index: 6, kind: input, shape index: {}]
  %s7 = inlined_call_operand.hbm [shape: bf16[256,256], index: 7, kind: input, shape index: {}]
  %s8 = inlined_call_operand.vmem [shape: f32[1,256], index: 8, kind: input, shape index: {}]
  %s9 = inlined_call_operand.hbm [shape: bf16[256,128], index: 9, kind: input, shape index: {}]
  %s10 = inlined_call_operand.vmem [shape: f32[1,128], index: 10, kind: input, shape index: {}]
  %s11 = inlined_call_operand.hbm [shape: f32[8,128], index: 11, kind: output, shape index: {}]
  %s12 = sld [smem:[#allocation0]]
  $region82: #{tpu_custom_call.1} parent=0
    _
  %s14 = ssub.s32 1, %s12
  %s15 = scalar_select 0, %s14, %s12
  $region1: #{tpu_custom_call.1} parent=0
    #allocation2 [shape = 'u8[4096]{0}', space=vmem, size = 0x1000, scoped, tag = 'input window, operand 0, single buffered']
    #allocation3 [shape = 's32[1]{0}', space=sflag, size = 0x4, scoped, tag = 'scoped memory for tpu_custom_call.1']
    #allocation4 [shape = 's32[1]{0}', space=sflag, size = 0x4, scoped, tag = 'scoped memory for tpu_custom_call.1']
    #allocation5 [shape = 'u8[4096]{0}', space=vmem, size = 0x1000, scoped, tag = 'input window, operand 1, single buffered']
    #allocation6 [shape = 's32[1]{0}', space=sflag, size = 0x4, scoped, tag = 'scoped memory for tpu_custom_call.1']
    #allocation7 [shape = 'u8[32768]{0}', space=vmem, size = 0x8000, scoped, tag = 'input window, operand 2, single buffered']
    #allocation8 [shape = 'u8[16384]{0}', space=vmem, size = 0x4000, scoped, tag = 'input window, operand 3, single buffered']
    #allocation9 [shape = 's32[1]{0}', space=sflag, size = 0x4, scoped, tag = 'scoped memory for tpu_custom_call.1']
    #allocation10 [shape = 'u8[131072]{0}', space=vmem, size = 0x20000, scoped, tag = 'input window, operand 5, single buffered']
    #allocation11 [shape = 'u8[131072]{0}', space=vmem, size = 0x20000, scoped, tag = 'input window, operand 7, single buffered']
    #allocation12 [shape = 's32[1]{0}', space=sflag, size = 0x4, scoped, tag = 'scoped memory for tpu_custom_call.1']
    #allocation13 [shape = 'u8[65536]{0}', space=vmem, size = 0x10000, scoped, tag = 'input window, operand 9, single buffered']
    #allocation14 [shape = 'u8[4096]{0}', space=vmem, size = 0x1000, scoped, tag = 'output window, operand 0, single buffered']
    %16 = vsyncpa [#allocation3], 0
    %17 = vsyncpa [#allocation6], 0
    %18 = vsyncpa [#allocation9], 0
    %19 = vsyncpa [#allocation12], 0
    %20 = vsyncpa [#allocation4], 0
    // Predicated region
    $region2: #{tpu_custom_call.1} parent=1 // pred_check
      _
    $region3: #{tpu_custom_call.1} parent=1 // pred_check_branch
      %22 = sbr.rel (0) target = $region5
    $region4: #{tpu_custom_call.1} parent=1 // pred_region
      %s24 = ssub.s32 128, 128
      %25 = vsyncadd [#allocation3], %s24
      %s27 = sshll.u32 [#allocation2], 4
      %s28 = int_to_ptr.vmem [resolvable:$true] %s27
      %30 = dma.hbm_to_vmem [thread:$0]  %s0, 128, %s28, [#allocation3]
    $region5: #{tpu_custom_call.1} parent=1 // pred_fallthru
      _
    // Predicated region
    $region6: #{tpu_custom_call.1} parent=1 // pred_check
      _
    $region7: #{tpu_custom_call.1} parent=1 // pred_check_branch
      %32 = sbr.rel (0) target = $region9
    $region8: #{tpu_custom_call.1} parent=1 // pred_region
      %s34 = ssub.s32 128, 128
      %35 = vsyncadd [#allocation6], %s34
      %s37 = sshll.u32 [#allocation5], 4
      %s38 = int_to_ptr.vmem [resolvable:$true] %s37
      %40 = dma.hbm_to_vmem [thread:$0]  %s1, 128, %s38, [#allocation6]
    $region9: #{tpu_custom_call.1} parent=1 // pred_fallthru
      _
    // Predicated region
    $region10: #{tpu_custom_call.1} parent=1 // pred_check
      _
    $region11: #{tpu_custom_call.1} parent=1 // pred_check_branch
      %42 = sbr.rel (0) target = $region13
    $region12: #{tpu_custom_call.1} parent=1 // pred_region
      %s44 = ssub.s32 1024, 1024
      %45 = vsyncadd [#allocation6], %s44
      %s46 = sshll.u32 [#allocation7], 4
      %s47 = int_to_ptr.vmem [resolvable:$true] %s46
      %52 = dma.hbm_to_vmem [thread:$0]  %s2, 1024, %s47, [#allocation6], 128, 128, 8
    $region13: #{tpu_custom_call.1} parent=1 // pred_fallthru
      _
    // Predicated region
    $region14: #{tpu_custom_call.1} parent=1 // pred_check
      _
    $region15: #{tpu_custom_call.1} parent=1 // pred_check_branch
      %54 = sbr.rel (0) target = $region17
    $region16: #{tpu_custom_call.1} parent=1 // pred_region
      %s56 = ssub.s32 512, 512
      %57 = vsyncadd [#allocation9], %s56
      %s58 = sshll.u32 [#allocation8], 4
      %s59 = int_to_ptr.vmem [resolvable:$true] %s58
      %64 = dma.hbm_to_vmem [thread:$0]  %s3, 512, %s59, [#allocation9], 128, 128, 8
    $region17: #{tpu_custom_call.1} parent=1 // pred_fallthru
      _
    // Predicated region
    $region18: #{tpu_custom_call.1} parent=1 // pred_check
      _
    $region19: #{tpu_custom_call.1} parent=1 // pred_check_branch
      %66 = sbr.rel (0) target = $region21
    $region20: #{tpu_custom_call.1} parent=1 // pred_region
      _
    $region21: #{tpu_custom_call.1} parent=1 // pred_fallthru
      _
    // Predicated region
    $region22: #{tpu_custom_call.1} parent=1 // pred_check
      _
    $region23: #{tpu_custom_call.1} parent=1 // pred_check_branch
      %68 = sbr.rel (0) target = $region25
    $region24: #{tpu_custom_call.1} parent=1 // pred_region
      %s70 = ssub.s32 4096, 4096
      %71 = vsyncadd [#allocation9], %s70
      %s72 = sshll.u32 [#allocation10], 4
      %s73 = int_to_ptr.vmem [resolvable:$true] %s72
      %78 = dma.hbm_to_vmem [thread:$0]  %s5, 4096, %s73, [#allocation9], 128, 128, 8
    $region25: #{tpu_custom_call.1} parent=1 // pred_fallthru
      _
    // Predicated region
    $region26: #{tpu_custom_call.1} parent=1 // pred_check
      _
    $region27: #{tpu_custom_call.1} parent=1 // pred_check_branch
      %80 = sbr.rel (0) target = $region29
    $region28: #{tpu_custom_call.1} parent=1 // pred_region
      _
    $region29: #{tpu_custom_call.1} parent=1 // pred_fallthru
      _
    // Predicated region
    $region30: #{tpu_custom_call.1} parent=1 // pred_check
      _
    $region31: #{tpu_custom_call.1} parent=1 // pred_check_branch
      %82 = sbr.rel (0) target = $region33
    $region32: #{tpu_custom_call.1} parent=1 // pred_region
      %s84 = ssub.s32 4096, 4096
      %85 = vsyncadd [#allocation12], %s84
      %s86 = sshll.u32 [#allocation11], 4
      %s87 = int_to_ptr.vmem [resolvable:$true] %s86
      %92 = dma.hbm_to_vmem [thread:$0]  %s7, 4096, %s87, [#allocation12], 128, 128, 8
    $region33: #{tpu_custom_call.1} parent=1 // pred_fallthru
      _
    // Predicated region
    $region34: #{tpu_custom_call.1} parent=1 // pred_check
      _
    $region35: #{tpu_custom_call.1} parent=1 // pred_check_branch
      %94 = sbr.rel (0) target = $region37
    $region36: #{tpu_custom_call.1} parent=1 // pred_region
      _
    $region37: #{tpu_custom_call.1} parent=1 // pred_fallthru
      _
    // Predicated region
    $region38: #{tpu_custom_call.1} parent=1 // pred_check
      _
    $region39: #{tpu_custom_call.1} parent=1 // pred_check_branch
      %96 = sbr.rel (0) target = $region41
    $region40: #{tpu_custom_call.1} parent=1 // pred_region
      %s98 = ssub.s32 2048, 2048
      %99 = vsyncadd [#allocation12], %s98
      %s100 = sshll.u32 [#allocation13], 4
      %s101 = int_to_ptr.vmem [resolvable:$true] %s100
      %106 = dma.hbm_to_vmem [thread:$0]  %s9, 2048, %s101, [#allocation12], 64, 64, 4
    $region41: #{tpu_custom_call.1} parent=1 // pred_fallthru
      _
    // Predicated region
    $region42: #{tpu_custom_call.1} parent=1 // pred_check
      _
    $region43: #{tpu_custom_call.1} parent=1 // pred_check_branch
      %108 = sbr.rel (0) target = $region45
    $region44: #{tpu_custom_call.1} parent=1 // pred_region
      _
    $region45: #{tpu_custom_call.1} parent=1 // pred_fallthru
      _
    // Predicated region
    $region46: #{tpu_custom_call.1} parent=1 // pred_check
      _
    $region47: #{tpu_custom_call.1} parent=1 // pred_check_branch
      %110 = sbr.rel (0) target = $region49
    $region48: #{tpu_custom_call.1} parent=1 // pred_region
      %111 = dma.done [#allocation3], 128
    $region49: #{tpu_custom_call.1} parent=1 // pred_fallthru
      _
    // Predicated region
    $region50: #{tpu_custom_call.1} parent=1 // pred_check
      _
    $region51: #{tpu_custom_call.1} parent=1 // pred_check_branch
      %113 = sbr.rel (0) target = $region53
    $region52: #{tpu_custom_call.1} parent=1 // pred_region
      %114 = dma.done [#allocation6], 128
    $region53: #{tpu_custom_call.1} parent=1 // pred_fallthru
      _
    // Predicated region
    $region54: #{tpu_custom_call.1} parent=1 // pred_check
      _
    $region55: #{tpu_custom_call.1} parent=1 // pred_check_branch
      %116 = sbr.rel (0) target = $region57
    $region56: #{tpu_custom_call.1} parent=1 // pred_region
      %117 = dma.done [#allocation6], 1024
    $region57: #{tpu_custom_call.1} parent=1 // pred_fallthru
      _
    // Predicated region
    $region58: #{tpu_custom_call.1} parent=1 // pred_check
      _
    $region59: #{tpu_custom_call.1} parent=1 // pred_check_branch
      %119 = sbr.rel (0) target = $region61
    $region60: #{tpu_custom_call.1} parent=1 // pred_region
      %120 = dma.done [#allocation9], 512
    $region61: #{tpu_custom_call.1} parent=1 // pred_fallthru
      _
    // Predicated region
    $region62: #{tpu_custom_call.1} parent=1 // pred_check
      _
    $region63: #{tpu_custom_call.1} parent=1 // pred_check_branch
      %122 = sbr.rel (0) target = $region65
    $region64: #{tpu_custom_call.1} parent=1 // pred_region
      %123 = dma.done [#allocation9], 4096
    $region65: #{tpu_custom_call.1} parent=1 // pred_fallthru
      _
    // Predicated region
    $region66: #{tpu_custom_call.1} parent=1 // pred_check
      _
    $region67: #{tpu_custom_call.1} parent=1 // pred_check_branch
      %125 = sbr.rel (0) target = $region69
    $region68: #{tpu_custom_call.1} parent=1 // pred_region
      %126 = dma.done [#allocation12], 4096
    $region69: #{tpu_custom_call.1} parent=1 // pred_fallthru
      _
    // Predicated region
    $region70: #{tpu_custom_call.1} parent=1 // pred_check
      _
    $region71: #{tpu_custom_call.1} parent=1 // pred_check_branch
      %128 = sbr.rel (0) target = $region73
    $region72: #{tpu_custom_call.1} parent=1 // pred_region
      %129 = dma.done [#allocation12], 2048
    $region73: #{tpu_custom_call.1} parent=1 // pred_fallthru
      _
    %v131 = vld [vmem:[#allocation2] sm:$0xff]
    %v132 = vpack.c.bf16 %v131, %v131
    %v133 = vld [vmem:[#allocation5] sm:$0xff]
    %v134 = vpack.c.bf16 %v133, %v133
    %v135 = vld [vmem:[#allocation7] sm:$0xff]
    %v136 = vld [vmem:[#allocation7 + $0x8] sm:$0xff]
    %v137 = vld [vmem:[#allocation7 + $0x10] sm:$0xff]
    %v138 = vld [vmem:[#allocation7 + $0x18] sm:$0xff]
    %v139 = vld [vmem:[#allocation7 + $0x20] sm:$0xff]
    %v140 = vld [vmem:[#allocation7 + $0x28] sm:$0xff]
    %v141 = vld [vmem:[#allocation7 + $0x30] sm:$0xff]
    %v142 = vld [vmem:[#allocation7 + $0x38] sm:$0xff]
    %v143 = vld [vmem:[#allocation8] sm:$0xff]
    %v144 = vld [vmem:[#allocation8 + $0x8] sm:$0xff]
    %v145 = vld [vmem:[#allocation8 + $0x10] sm:$0xff]
    %v146 = vld [vmem:[#allocation8 + $0x18] sm:$0xff]
    %v151 = vunpack.c.l.b16 %v143
    %v152 = vunpack.c.h.b16 %v143
    %v153 = vunpack.c.l.b16 %v144
    %v154 = vunpack.c.h.b16 %v144
    %v155 = vunpack.c.l.b16 %v145
    %v156 = vunpack.c.h.b16 %v145
    %v157 = vunpack.c.l.b16 %v146
    %v158 = vunpack.c.h.b16 %v146
    %v159 = vpack.c.b16 %v153, %v151
    %v160 = vpack.c.b16 %v154, %v152
    %v161 = vpack.c.b16 %v157, %v155
    %v162 = vpack.c.b16 %v158, %v156
    %vm167 = vcmask 261120
    %v169 = vsel %vm167, %v134, 0
    %171 = vmatprep.subr.bf16.mxu0 %v160
    %172 = vmatpush1.bf16.msra.mxu0 %v159
    %173 = vmatprep.subr.bf16.mxu0 %v162
    %174 = vmatpush1.bf16.msra.mxu0 %v161
    %175 = vmatprep.subr.bf16.mxu0 0
    %176 = vmatpush1.bf16.msra.mxu0 0
    %177 = vmatprep.subr.bf16.mxu0 0
    %178 = vmatpush1.bf16.msra.mxu0 0
    %179 = vmatprep.subr.bf16.mxu0 0
    %180 = vmatpush1.bf16.msra.mxu0 0
    %181 = vmatprep.subr.bf16.mxu0 0
    %182 = vmatpush1.bf16.msra.mxu0 0
    %183 = vmatprep.subr.bf16.mxu0 0
    %184 = vmatpush1.bf16.msra.mxu0 0
    %185 = vmatprep.subr.bf16.mxu0 0
    %186 = vmatpush1.bf16.msra.mxu0 0
    %187 = vmatprep.subr.bf16.mxu0 0
    %188 = vmatpush1.bf16.msra.mxu0 0
    %189 = vmatprep.subr.bf16.mxu0 0
    %190 = vmatpush1.bf16.msra.mxu0 0
    %191 = vmatprep.subr.bf16.mxu0 0
    %192 = vmatpush1.bf16.msra.mxu0 0
    %193 = vmatprep.subr.bf16.mxu0 0
    %194 = vmatpush1.bf16.msra.mxu0 0
    %195 = vmatprep.subr.bf16.mxu0 0
    %196 = vmatpush1.bf16.msra.mxu0 0
    %197 = vmatprep.subr.bf16.mxu0 0
    %198 = vmatpush1.bf16.msra.mxu0 0
    %199 = vmatprep.subr.bf16.mxu0 0
    %200 = vmatpush1.bf16.msra.mxu0 0
    %201 = vmatprep.subr.bf16.mxu0 0
    %202 = vmatpush1.bf16.msra.mxu0 0
    %203 = vmatprep.mubr.bf16.mxu0 0
    %204 = vmatmul.mubr.bf16.gmra.mrb[0].mxu0 %v169
    %v205 = vpop.f32.mrb[0].mxu0
    %v206 = vadd.f32 0.0, %v205
    %v207 = vpop.f32.mrb[0].mxu0
    %v208 = vadd.f32 0.0, %v207
    %v209 = vpop.f32.mrb[0].mxu0
    %v210 = vpop.f32.mrb[0].mxu0
    %211 = vdwg.mxu0
    %v220 = vunpack.c.l.b16 %v135
    %v221 = vunpack.c.h.b16 %v135
    %v222 = vunpack.c.l.b16 %v136
    %v223 = vunpack.c.h.b16 %v136
    %v224 = vunpack.c.l.b16 %v137
    %v225 = vunpack.c.h.b16 %v137
    %v226 = vunpack.c.l.b16 %v138
    %v227 = vunpack.c.h.b16 %v138
    %v228 = vunpack.c.l.b16 %v139
    %v229 = vunpack.c.h.b16 %v139
    %v230 = vunpack.c.l.b16 %v140
    %v231 = vunpack.c.h.b16 %v140
    %v232 = vunpack.c.l.b16 %v141
    %v233 = vunpack.c.h.b16 %v141
    %v234 = vunpack.c.l.b16 %v142
    %v235 = vunpack.c.h.b16 %v142
    %v236 = vpack.c.b16 %v222, %v220
    %v237 = vpack.c.b16 %v223, %v221
    %v238 = vpack.c.b16 %v226, %v224
    %v239 = vpack.c.b16 %v227, %v225
    %v240 = vpack.c.b16 %v230, %v228
    %v241 = vpack.c.b16 %v231, %v229
    %v242 = vpack.c.b16 %v234, %v232
    %v243 = vpack.c.b16 %v235, %v233
    %vm252 = vcmask 523264
    %v254 = vsel %vm252, %v132, 0
    %256 = vmatprep.subr.bf16.mxu0 %v237
    %257 = vmatpush1.bf16.msra.mxu0 %v236
    %258 = vmatprep.subr.bf16.mxu0 %v239
    %259 = vmatpush1.bf16.msra.mxu0 %v238
    %260 = vmatprep.subr.bf16.mxu0 %v241
    %261 = vmatpush1.bf16.msra.mxu0 %v240
    %262 = vmatprep.subr.bf16.mxu0 %v243
    %263 = vmatpush1.bf16.msra.mxu0 %v242
    %264 = vmatprep.subr.bf16.mxu0 0
    %265 = vmatpush1.bf16.msra.mxu0 0
    %266 = vmatprep.subr.bf16.mxu0 0
    %267 = vmatpush1.bf16.msra.mxu0 0
    %268 = vmatprep.subr.bf16.mxu0 0
    %269 = vmatpush1.bf16.msra.mxu0 0
    %270 = vmatprep.subr.bf16.mxu0 0
    %271 = vmatpush1.bf16.msra.mxu0 0
    %272 = vmatprep.subr.bf16.mxu0 0
    %273 = vmatpush1.bf16.msra.mxu0 0
    %274 = vmatprep.subr.bf16.mxu0 0
    %275 = vmatpush1.bf16.msra.mxu0 0
    %276 = vmatprep.subr.bf16.mxu0 0
    %277 = vmatpush1.bf16.msra.mxu0 0
    %278 = vmatprep.subr.bf16.mxu0 0
    %279 = vmatpush1.bf16.msra.mxu0 0
    %280 = vmatprep.subr.bf16.mxu0 0
    %281 = vmatpush1.bf16.msra.mxu0 0
    %282 = vmatprep.subr.bf16.mxu0 0
    %283 = vmatpush1.bf16.msra.mxu0 0
    %284 = vmatprep.subr.bf16.mxu0 0
    %285 = vmatpush1.bf16.msra.mxu0 0
    %286 = vmatprep.subr.bf16.mxu0 0
    %287 = vmatpush1.bf16.msra.mxu0 0
    %288 = vmatprep.mubr.bf16.mxu0 0
    %289 = vmatmul.mubr.bf16.gmra.mrb[0].mxu0 %v254
    %v290 = vpop.f32.mrb[0].mxu0
    %v291 = vadd.f32 %v206, %v290
    %v292 = vpop.f32.mrb[0].mxu0
    %v293 = vadd.f32 %v208, %v292
    %v294 = vpop.f32.mrb[0].mxu0
    %v295 = vpop.f32.mrb[0].mxu0
    %296 = vdwg.mxu0
    %v297 = vld [vmem:[%s4] sm:$0x3]
    %v299 = vlaneseq
    %v300 = vshrl.u32 %v299, 7
    %v301 = vsub.s32 0, %v300
    %v302 = vrot.slane %v297, %v301
    %v303 = vlaneseq
    %v304 = vshrl.u32 %v303, 7
    %v305 = vsub.s32 1, %v304
    %v306 = vrot.slane %v297, %v305
    %v309 = vadd.f32 %v291, %v302
    %v310 = vadd.f32 %v293, %v306
    %vm311 = vcmp.gt.f32.partialorder %v309, 0.0
    %vm312 = vcmp.gt.f32.partialorder %v310, 0.0
    %v313 = vmul.f32 %v309, 0.2
    %v314 = vmul.f32 %v310, 0.2
    %v315 = vsel %vm311, %v309, %v313
    %v316 = vsel %vm312, %v310, %v314
    %v317 = vpack.c.bf16 %v315, %v315
    %v318 = vpack.c.bf16 %v316, %v316
    %v319 = vld [vmem:[#allocation10] sm:$0xff]
    %v320 = vld [vmem:[#allocation10 + $0x8] sm:$0xff]
    %v321 = vld [vmem:[#allocation10 + $0x10] sm:$0xff]
    %v322 = vld [vmem:[#allocation10 + $0x18] sm:$0xff]
    %v323 = vld [vmem:[#allocation10 + $0x20] sm:$0xff]
    %v324 = vld [vmem:[#allocation10 + $0x28] sm:$0xff]
    %v325 = vld [vmem:[#allocation10 + $0x30] sm:$0xff]
    %v326 = vld [vmem:[#allocation10 + $0x38] sm:$0xff]
    %v327 = vld [vmem:[#allocation10 + $0x40] sm:$0xff]
    %v328 = vld [vmem:[#allocation10 + $0x48] sm:$0xff]
    %v329 = vld [vmem:[#allocation10 + $0x50] sm:$0xff]
    %v330 = vld [vmem:[#allocation10 + $0x58] sm:$0xff]
    %v331 = vld [vmem:[#allocation10 + $0x60] sm:$0xff]
    %v332 = vld [vmem:[#allocation10 + $0x68] sm:$0xff]
    %v333 = vld [vmem:[#allocation10 + $0x70] sm:$0xff]
    %v334 = vld [vmem:[#allocation10 + $0x78] sm:$0xff]
    %v335 = vld [vmem:[#allocation10 + $0x80] sm:$0xff]
    %v336 = vld [vmem:[#allocation10 + $0x88] sm:$0xff]
    %v337 = vld [vmem:[#allocation10 + $0x90] sm:$0xff]
    %v338 = vld [vmem:[#allocation10 + $0x98] sm:$0xff]
    %v339 = vld [vmem:[#allocation10 + $0xa0] sm:$0xff]
    %v340 = vld [vmem:[#allocation10 + $0xa8] sm:$0xff]
    %v341 = vld [vmem:[#allocation10 + $0xb0] sm:$0xff]
    %v342 = vld [vmem:[#allocation10 + $0xb8] sm:$0xff]
    %v343 = vld [vmem:[#allocation10 + $0xc0] sm:$0xff]
    %v344 = vld [vmem:[#allocation10 + $0xc8] sm:$0xff]
    %v345 = vld [vmem:[#allocation10 + $0xd0] sm:$0xff]
    %v346 = vld [vmem:[#allocation10 + $0xd8] sm:$0xff]
    %v347 = vld [vmem:[#allocation10 + $0xe0] sm:$0xff]
    %v348 = vld [vmem:[#allocation10 + $0xe8] sm:$0xff]
    %v349 = vld [vmem:[#allocation10 + $0xf0] sm:$0xff]
    %v350 = vld [vmem:[#allocation10 + $0xf8] sm:$0xff]
    %v351 = vld [vmem:[%s6] sm:$0x3]
    %v353 = vlaneseq
    %v354 = vshrl.u32 %v353, 7
    %v355 = vsub.s32 0, %v354
    %v356 = vrot.slane %v351, %v355
    %v357 = vlaneseq
    %v358 = vshrl.u32 %v357, 7
    %v359 = vsub.s32 1, %v358
    %v360 = vrot.slane %v351, %v359
    %v395 = vunpack.c.l.b16 %v319
    %v396 = vunpack.c.h.b16 %v319
    %v397 = vunpack.c.l.b16 %v320
    %v398 = vunpack.c.h.b16 %v320
    %v399 = vunpack.c.l.b16 %v321
    %v400 = vunpack.c.h.b16 %v321
    %v401 = vunpack.c.l.b16 %v322
    %v402 = vunpack.c.h.b16 %v322
    %v403 = vunpack.c.l.b16 %v323
    %v404 = vunpack.c.h.b16 %v323
    %v405 = vunpack.c.l.b16 %v324
    %v406 = vunpack.c.h.b16 %v324
    %v407 = vunpack.c.l.b16 %v325
    %v408 = vunpack.c.h.b16 %v325
    %v409 = vunpack.c.l.b16 %v326
    %v410 = vunpack.c.h.b16 %v326
    %v411 = vunpack.c.l.b16 %v327
    %v412 = vunpack.c.h.b16 %v327
    %v413 = vunpack.c.l.b16 %v328
    %v414 = vunpack.c.h.b16 %v328
    %v415 = vunpack.c.l.b16 %v329
    %v416 = vunpack.c.h.b16 %v329
    %v417 = vunpack.c.l.b16 %v330
    %v418 = vunpack.c.h.b16 %v330
    %v419 = vunpack.c.l.b16 %v331
    %v420 = vunpack.c.h.b16 %v331
    %v421 = vunpack.c.l.b16 %v332
    %v422 = vunpack.c.h.b16 %v332
    %v423 = vunpack.c.l.b16 %v333
    %v424 = vunpack.c.h.b16 %v333
    %v425 = vunpack.c.l.b16 %v334
    %v426 = vunpack.c.h.b16 %v334
    %v427 = vunpack.c.l.b16 %v335
    %v428 = vunpack.c.h.b16 %v335
    %v429 = vunpack.c.l.b16 %v336
    %v430 = vunpack.c.h.b16 %v336
    %v431 = vunpack.c.l.b16 %v337
    %v432 = vunpack.c.h.b16 %v337
    %v433 = vunpack.c.l.b16 %v338
    %v434 = vunpack.c.h.b16 %v338
    %v435 = vunpack.c.l.b16 %v339
    %v436 = vunpack.c.h.b16 %v339
    %v437 = vunpack.c.l.b16 %v340
    %v438 = vunpack.c.h.b16 %v340
    %v439 = vunpack.c.l.b16 %v341
    %v440 = vunpack.c.h.b16 %v341
    %v441 = vunpack.c.l.b16 %v342
    %v442 = vunpack.c.h.b16 %v342
    %v443 = vunpack.c.l.b16 %v343
    %v444 = vunpack.c.h.b16 %v343
    %v445 = vunpack.c.l.b16 %v344
    %v446 = vunpack.c.h.b16 %v344
    %v447 = vunpack.c.l.b16 %v345
    %v448 = vunpack.c.h.b16 %v345
    %v449 = vunpack.c.l.b16 %v346
    %v450 = vunpack.c.h.b16 %v346
    %v451 = vunpack.c.l.b16 %v347
    %v452 = vunpack.c.h.b16 %v347
    %v453 = vunpack.c.l.b16 %v348
    %v454 = vunpack.c.h.b16 %v348
    %v455 = vunpack.c.l.b16 %v349
    %v456 = vunpack.c.h.b16 %v349
    %v457 = vunpack.c.l.b16 %v350
    %v458 = vunpack.c.h.b16 %v350
    %v459 = vpack.c.b16 %v397, %v395
    %v460 = vpack.c.b16 %v398, %v396
    %v461 = vpack.c.b16 %v401, %v399
    %v462 = vpack.c.b16 %v402, %v400
    %v463 = vpack.c.b16 %v405, %v403
    %v464 = vpack.c.b16 %v406, %v404
    %v465 = vpack.c.b16 %v409, %v407
    %v466 = vpack.c.b16 %v410, %v408
    %v467 = vpack.c.b16 %v413, %v411
    %v468 = vpack.c.b16 %v414, %v412
    %v469 = vpack.c.b16 %v417, %v415
    %v470 = vpack.c.b16 %v418, %v416
    %v471 = vpack.c.b16 %v421, %v419
    %v472 = vpack.c.b16 %v422, %v420
    %v473 = vpack.c.b16 %v425, %v423
    %v474 = vpack.c.b16 %v426, %v424
    %v475 = vpack.c.b16 %v429, %v427
    %v476 = vpack.c.b16 %v430, %v428
    %v477 = vpack.c.b16 %v433, %v431
    %v478 = vpack.c.b16 %v434, %v432
    %v479 = vpack.c.b16 %v437, %v435
    %v480 = vpack.c.b16 %v438, %v436
    %v481 = vpack.c.b16 %v441, %v439
    %v482 = vpack.c.b16 %v442, %v440
    %v483 = vpack.c.b16 %v445, %v443
    %v484 = vpack.c.b16 %v446, %v444
    %v485 = vpack.c.b16 %v449, %v447
    %v486 = vpack.c.b16 %v450, %v448
    %v487 = vpack.c.b16 %v453, %v451
    %v488 = vpack.c.b16 %v454, %v452
    %v489 = vpack.c.b16 %v457, %v455
    %v490 = vpack.c.b16 %v458, %v456
    %523 = vmatprep.subr.bf16.mxu0 %v460
    %524 = vmatpush1.bf16.msra.mxu0 %v459
    %525 = vmatprep.subr.bf16.mxu0 %v462
    %526 = vmatpush1.bf16.msra.mxu0 %v461
    %527 = vmatprep.subr.bf16.mxu0 %v464
    %528 = vmatpush1.bf16.msra.mxu0 %v463
    %529 = vmatprep.subr.bf16.mxu0 %v466
    %530 = vmatpush1.bf16.msra.mxu0 %v465
    %531 = vmatprep.subr.bf16.mxu0 %v468
    %532 = vmatpush1.bf16.msra.mxu0 %v467
    %533 = vmatprep.subr.bf16.mxu0 %v470
    %534 = vmatpush1.bf16.msra.mxu0 %v469
    %535 = vmatprep.subr.bf16.mxu0 %v472
    %536 = vmatpush1.bf16.msra.mxu0 %v471
    %537 = vmatprep.subr.bf16.mxu0 %v474
    %538 = vmatpush1.bf16.msra.mxu0 %v473
    %539 = vmatprep.subr.bf16.mxu0 %v476
    %540 = vmatpush1.bf16.msra.mxu0 %v475
    %541 = vmatprep.subr.bf16.mxu0 %v478
    %542 = vmatpush1.bf16.msra.mxu0 %v477
    %543 = vmatprep.subr.bf16.mxu0 %v480
    %544 = vmatpush1.bf16.msra.mxu0 %v479
    %545 = vmatprep.subr.bf16.mxu0 %v482
    %546 = vmatpush1.bf16.msra.mxu0 %v481
    %547 = vmatprep.subr.bf16.mxu0 %v484
    %548 = vmatpush1.bf16.msra.mxu0 %v483
    %549 = vmatprep.subr.bf16.mxu0 %v486
    %550 = vmatpush1.bf16.msra.mxu0 %v485
    %551 = vmatprep.subr.bf16.mxu0 %v488
    %552 = vmatpush1.bf16.msra.mxu0 %v487
    %553 = vmatprep.subr.bf16.mxu0 %v490
    %554 = vmatpush1.bf16.msra.mxu0 %v489
    %555 = vmatprep.mubr.bf16.mxu0 %v318
    %556 = vmatmul.mubr.bf16.gmra.mrb[0].mxu0 %v317
    %v557 = vpop.f32.mrb[0].mxu0
    %v558 = vadd.f32 %v356, %v557
    %v559 = vpop.f32.mrb[0].mxu0
    %v560 = vadd.f32 %v360, %v559
    %v561 = vpop.f32.mrb[0].mxu0
    %v562 = vpop.f32.mrb[0].mxu0
    %563 = vdwg.mxu0
    %vm564 = vcmp.gt.f32.partialorder %v558, 0.0
    %vm565 = vcmp.gt.f32.partialorder %v560, 0.0
    %v566 = vmul.f32 %v558, 0.2
    %v567 = vmul.f32 %v560, 0.2
    %v568 = vsel %vm564, %v558, %v566
    %v569 = vsel %vm565, %v560, %v567
    %v570 = vpack.c.bf16 %v568, %v568
    %v571 = vpack.c.bf16 %v569, %v569
    %v572 = vld [vmem:[#allocation11] sm:$0xff]
    %v573 = vld [vmem:[#allocation11 + $0x8] sm:$0xff]
    %v574 = vld [vmem:[#allocation11 + $0x10] sm:$0xff]
    %v575 = vld [vmem:[#allocation11 + $0x18] sm:$0xff]
    %v576 = vld [vmem:[#allocation11 + $0x20] sm:$0xff]
    %v577 = vld [vmem:[#allocation11 + $0x28] sm:$0xff]
    %v578 = vld [vmem:[#allocation11 + $0x30] sm:$0xff]
    %v579 = vld [vmem:[#allocation11 + $0x38] sm:$0xff]
    %v580 = vld [vmem:[#allocation11 + $0x40] sm:$0xff]
    %v581 = vld [vmem:[#allocation11 + $0x48] sm:$0xff]
    %v582 = vld [vmem:[#allocation11 + $0x50] sm:$0xff]
    %v583 = vld [vmem:[#allocation11 + $0x58] sm:$0xff]
    %v584 = vld [vmem:[#allocation11 + $0x60] sm:$0xff]
    %v585 = vld [vmem:[#allocation11 + $0x68] sm:$0xff]
    %v586 = vld [vmem:[#allocation11 + $0x70] sm:$0xff]
    %v587 = vld [vmem:[#allocation11 + $0x78] sm:$0xff]
    %v588 = vld [vmem:[#allocation11 + $0x80] sm:$0xff]
    %v589 = vld [vmem:[#allocation11 + $0x88] sm:$0xff]
    %v590 = vld [vmem:[#allocation11 + $0x90] sm:$0xff]
    %v591 = vld [vmem:[#allocation11 + $0x98] sm:$0xff]
    %v592 = vld [vmem:[#allocation11 + $0xa0] sm:$0xff]
    %v593 = vld [vmem:[#allocation11 + $0xa8] sm:$0xff]
    %v594 = vld [vmem:[#allocation11 + $0xb0] sm:$0xff]
    %v595 = vld [vmem:[#allocation11 + $0xb8] sm:$0xff]
    %v596 = vld [vmem:[#allocation11 + $0xc0] sm:$0xff]
    %v597 = vld [vmem:[#allocation11 + $0xc8] sm:$0xff]
    %v598 = vld [vmem:[#allocation11 + $0xd0] sm:$0xff]
    %v599 = vld [vmem:[#allocation11 + $0xd8] sm:$0xff]
    %v600 = vld [vmem:[#allocation11 + $0xe0] sm:$0xff]
    %v601 = vld [vmem:[#allocation11 + $0xe8] sm:$0xff]
    %v602 = vld [vmem:[#allocation11 + $0xf0] sm:$0xff]
    %v603 = vld [vmem:[#allocation11 + $0xf8] sm:$0xff]
    %v604 = vld [vmem:[%s8] sm:$0x3]
    %v606 = vlaneseq
    %v607 = vshrl.u32 %v606, 7
    %v608 = vsub.s32 0, %v607
    %v609 = vrot.slane %v604, %v608
    %v610 = vlaneseq
    %v611 = vshrl.u32 %v610, 7
    %v612 = vsub.s32 1, %v611
    %v613 = vrot.slane %v604, %v612
    %v648 = vunpack.c.l.b16 %v572
    %v649 = vunpack.c.h.b16 %v572
    %v650 = vunpack.c.l.b16 %v573
    %v651 = vunpack.c.h.b16 %v573
    %v652 = vunpack.c.l.b16 %v574
    %v653 = vunpack.c.h.b16 %v574
    %v654 = vunpack.c.l.b16 %v575
    %v655 = vunpack.c.h.b16 %v575
    %v656 = vunpack.c.l.b16 %v576
    %v657 = vunpack.c.h.b16 %v576
    %v658 = vunpack.c.l.b16 %v577
    %v659 = vunpack.c.h.b16 %v577
    %v660 = vunpack.c.l.b16 %v578
    %v661 = vunpack.c.h.b16 %v578
    %v662 = vunpack.c.l.b16 %v579
    %v663 = vunpack.c.h.b16 %v579
    %v664 = vunpack.c.l.b16 %v580
    %v665 = vunpack.c.h.b16 %v580
    %v666 = vunpack.c.l.b16 %v581
    %v667 = vunpack.c.h.b16 %v581
    %v668 = vunpack.c.l.b16 %v582
    %v669 = vunpack.c.h.b16 %v582
    %v670 = vunpack.c.l.b16 %v583
    %v671 = vunpack.c.h.b16 %v583
    %v672 = vunpack.c.l.b16 %v584
    %v673 = vunpack.c.h.b16 %v584
    %v674 = vunpack.c.l.b16 %v585
    %v675 = vunpack.c.h.b16 %v585
    %v676 = vunpack.c.l.b16 %v586
    %v677 = vunpack.c.h.b16 %v586
    %v678 = vunpack.c.l.b16 %v587
    %v679 = vunpack.c.h.b16 %v587
    %v680 = vunpack.c.l.b16 %v588
    %v681 = vunpack.c.h.b16 %v588
    %v682 = vunpack.c.l.b16 %v589
    %v683 = vunpack.c.h.b16 %v589
    %v684 = vunpack.c.l.b16 %v590
    %v685 = vunpack.c.h.b16 %v590
    %v686 = vunpack.c.l.b16 %v591
    %v687 = vunpack.c.h.b16 %v591
    %v688 = vunpack.c.l.b16 %v592
    %v689 = vunpack.c.h.b16 %v592
    %v690 = vunpack.c.l.b16 %v593
    %v691 = vunpack.c.h.b16 %v593
    %v692 = vunpack.c.l.b16 %v594
    %v693 = vunpack.c.h.b16 %v594
    %v694 = vunpack.c.l.b16 %v595
    %v695 = vunpack.c.h.b16 %v595
    %v696 = vunpack.c.l.b16 %v596
    %v697 = vunpack.c.h.b16 %v596
    %v698 = vunpack.c.l.b16 %v597
    %v699 = vunpack.c.h.b16 %v597
    %v700 = vunpack.c.l.b16 %v598
    %v701 = vunpack.c.h.b16 %v598
    %v702 = vunpack.c.l.b16 %v599
    %v703 = vunpack.c.h.b16 %v599
    %v704 = vunpack.c.l.b16 %v600
    %v705 = vunpack.c.h.b16 %v600
    %v706 = vunpack.c.l.b16 %v601
    %v707 = vunpack.c.h.b16 %v601
    %v708 = vunpack.c.l.b16 %v602
    %v709 = vunpack.c.h.b16 %v602
    %v710 = vunpack.c.l.b16 %v603
    %v711 = vunpack.c.h.b16 %v603
    %v712 = vpack.c.b16 %v650, %v648
    %v713 = vpack.c.b16 %v651, %v649
    %v714 = vpack.c.b16 %v654, %v652
    %v715 = vpack.c.b16 %v655, %v653
    %v716 = vpack.c.b16 %v658, %v656
    %v717 = vpack.c.b16 %v659, %v657
    %v718 = vpack.c.b16 %v662, %v660
    %v719 = vpack.c.b16 %v663, %v661
    %v720 = vpack.c.b16 %v666, %v664
    %v721 = vpack.c.b16 %v667, %v665
    %v722 = vpack.c.b16 %v670, %v668
    %v723 = vpack.c.b16 %v671, %v669
    %v724 = vpack.c.b16 %v674, %v672
    %v725 = vpack.c.b16 %v675, %v673
    %v726 = vpack.c.b16 %v678, %v676
    %v727 = vpack.c.b16 %v679, %v677
    %v728 = vpack.c.b16 %v682, %v680
    %v729 = vpack.c.b16 %v683, %v681
    %v730 = vpack.c.b16 %v686, %v684
    %v731 = vpack.c.b16 %v687, %v685
    %v732 = vpack.c.b16 %v690, %v688
    %v733 = vpack.c.b16 %v691, %v689
    %v734 = vpack.c.b16 %v694, %v692
    %v735 = vpack.c.b16 %v695, %v693
    %v736 = vpack.c.b16 %v698, %v696
    %v737 = vpack.c.b16 %v699, %v697
    %v738 = vpack.c.b16 %v702, %v700
    %v739 = vpack.c.b16 %v703, %v701
    %v740 = vpack.c.b16 %v706, %v704
    %v741 = vpack.c.b16 %v707, %v705
    %v742 = vpack.c.b16 %v710, %v708
    %v743 = vpack.c.b16 %v711, %v709
    %776 = vmatprep.subr.bf16.mxu0 %v713
    %777 = vmatpush1.bf16.msra.mxu0 %v712
    %778 = vmatprep.subr.bf16.mxu0 %v715
    %779 = vmatpush1.bf16.msra.mxu0 %v714
    %780 = vmatprep.subr.bf16.mxu0 %v717
    %781 = vmatpush1.bf16.msra.mxu0 %v716
    %782 = vmatprep.subr.bf16.mxu0 %v719
    %783 = vmatpush1.bf16.msra.mxu0 %v718
    %784 = vmatprep.subr.bf16.mxu0 %v721
    %785 = vmatpush1.bf16.msra.mxu0 %v720
    %786 = vmatprep.subr.bf16.mxu0 %v723
    %787 = vmatpush1.bf16.msra.mxu0 %v722
    %788 = vmatprep.subr.bf16.mxu0 %v725
    %789 = vmatpush1.bf16.msra.mxu0 %v724
    %790 = vmatprep.subr.bf16.mxu0 %v727
    %791 = vmatpush1.bf16.msra.mxu0 %v726
    %792 = vmatprep.subr.bf16.mxu0 %v729
    %793 = vmatpush1.bf16.msra.mxu0 %v728
    %794 = vmatprep.subr.bf16.mxu0 %v731
    %795 = vmatpush1.bf16.msra.mxu0 %v730
    %796 = vmatprep.subr.bf16.mxu0 %v733
    %797 = vmatpush1.bf16.msra.mxu0 %v732
    %798 = vmatprep.subr.bf16.mxu0 %v735
    %799 = vmatpush1.bf16.msra.mxu0 %v734
    %800 = vmatprep.subr.bf16.mxu0 %v737
    %801 = vmatpush1.bf16.msra.mxu0 %v736
    %802 = vmatprep.subr.bf16.mxu0 %v739
    %803 = vmatpush1.bf16.msra.mxu0 %v738
    %804 = vmatprep.subr.bf16.mxu0 %v741
    %805 = vmatpush1.bf16.msra.mxu0 %v740
    %806 = vmatprep.subr.bf16.mxu0 %v743
    %807 = vmatpush1.bf16.msra.mxu0 %v742
    %808 = vmatprep.mubr.bf16.mxu0 %v571
    %809 = vmatmul.mubr.bf16.gmra.mrb[0].mxu0 %v570
    %v810 = vpop.f32.mrb[0].mxu0
    %v811 = vadd.f32 %v609, %v810
    %v812 = vpop.f32.mrb[0].mxu0
    %v813 = vadd.f32 %v613, %v812
    %v814 = vpop.f32.mrb[0].mxu0
    %v815 = vpop.f32.mrb[0].mxu0
    %816 = vdwg.mxu0
    %vm817 = vcmp.gt.f32.partialorder %v811, 0.0
    %vm818 = vcmp.gt.f32.partialorder %v813, 0.0
    %v819 = vmul.f32 %v811, 0.2
    %v820 = vmul.f32 %v813, 0.2
    %v821 = vsel %vm817, %v811, %v819
    %v822 = vsel %vm818, %v813, %v820
    %v823 = vpack.c.bf16 %v821, %v821
    %v824 = vpack.c.bf16 %v822, %v822
    %v825 = vld [vmem:[#allocation13] sm:$0xf]
    %v826 = vld [vmem:[#allocation13 + $0x4] sm:$0xf]
    %v827 = vld [vmem:[#allocation13 + $0x8] sm:$0xf]
    %v828 = vld [vmem:[#allocation13 + $0xc] sm:$0xf]
    %v829 = vld [vmem:[#allocation13 + $0x10] sm:$0xf]
    %v830 = vld [vmem:[#allocation13 + $0x14] sm:$0xf]
    %v831 = vld [vmem:[#allocation13 + $0x18] sm:$0xf]
    %v832 = vld [vmem:[#allocation13 + $0x1c] sm:$0xf]
    %v833 = vld [vmem:[#allocation13 + $0x20] sm:$0xf]
    %v834 = vld [vmem:[#allocation13 + $0x24] sm:$0xf]
    %v835 = vld [vmem:[#allocation13 + $0x28] sm:$0xf]
    %v836 = vld [vmem:[#allocation13 + $0x2c] sm:$0xf]
    %v837 = vld [vmem:[#allocation13 + $0x30] sm:$0xf]
    %v838 = vld [vmem:[#allocation13 + $0x34] sm:$0xf]
    %v839 = vld [vmem:[#allocation13 + $0x38] sm:$0xf]
    %v840 = vld [vmem:[#allocation13 + $0x3c] sm:$0xf]
    %v841 = vld [vmem:[#allocation13 + $0x40] sm:$0xf]
    %v842 = vld [vmem:[#allocation13 + $0x44] sm:$0xf]
    %v843 = vld [vmem:[#allocation13 + $0x48] sm:$0xf]
    %v844 = vld [vmem:[#allocation13 + $0x4c] sm:$0xf]
    %v845 = vld [vmem:[#allocation13 + $0x50] sm:$0xf]
    %v846 = vld [vmem:[#allocation13 + $0x54] sm:$0xf]
    %v847 = vld [vmem:[#allocation13 + $0x58] sm:$0xf]
    %v848 = vld [vmem:[#allocation13 + $0x5c] sm:$0xf]
    %v849 = vld [vmem:[#allocation13 + $0x60] sm:$0xf]
    %v850 = vld [vmem:[#allocation13 + $0x64] sm:$0xf]
    %v851 = vld [vmem:[#allocation13 + $0x68] sm:$0xf]
    %v852 = vld [vmem:[#allocation13 + $0x6c] sm:$0xf]
    %v853 = vld [vmem:[#allocation13 + $0x70] sm:$0xf]
    %v854 = vld [vmem:[#allocation13 + $0x74] sm:$0xf]
    %v855 = vld [vmem:[#allocation13 + $0x78] sm:$0xf]
    %v856 = vld [vmem:[#allocation13 + $0x7c] sm:$0xf]
    %v857 = vld [vmem:[%s10] sm:$0x1]
    %v859 = vlaneseq
    %v860 = vshrl.u32 %v859, 7
    %v861 = vsub.s32 0, %v860
    %v862 = vrot.slane %v857, %v861
    %v896 = vunpack.c.l.b16 %v825
    %v897 = vunpack.c.l.b16 %v826
    %v898 = vunpack.c.l.b16 %v827
    %v899 = vunpack.c.l.b16 %v828
    %v900 = vunpack.c.l.b16 %v829
    %v901 = vunpack.c.l.b16 %v830
    %v902 = vunpack.c.l.b16 %v831
    %v903 = vunpack.c.l.b16 %v832
    %v904 = vunpack.c.l.b16 %v833
    %v905 = vunpack.c.l.b16 %v834
    %v906 = vunpack.c.l.b16 %v835
    %v907 = vunpack.c.l.b16 %v836
    %v908 = vunpack.c.l.b16 %v837
    %v909 = vunpack.c.l.b16 %v838
    %v910 = vunpack.c.l.b16 %v839
    %v911 = vunpack.c.l.b16 %v840
    %v912 = vunpack.c.l.b16 %v841
    %v913 = vunpack.c.l.b16 %v842
    %v914 = vunpack.c.l.b16 %v843
    %v915 = vunpack.c.l.b16 %v844
    %v916 = vunpack.c.l.b16 %v845
    %v917 = vunpack.c.l.b16 %v846
    %v918 = vunpack.c.l.b16 %v847
    %v919 = vunpack.c.l.b16 %v848
    %v920 = vunpack.c.l.b16 %v849
    %v921 = vunpack.c.l.b16 %v850
    %v922 = vunpack.c.l.b16 %v851
    %v923 = vunpack.c.l.b16 %v852
    %v924 = vunpack.c.l.b16 %v853
    %v925 = vunpack.c.l.b16 %v854
    %v926 = vunpack.c.l.b16 %v855
    %v927 = vunpack.c.l.b16 %v856
    %v928 = vpack.c.b16 %v897, %v896
    %v929 = vpack.c.b16 %v899, %v898
    %v930 = vpack.c.b16 %v901, %v900
    %v931 = vpack.c.b16 %v903, %v902
    %v932 = vpack.c.b16 %v905, %v904
    %v933 = vpack.c.b16 %v907, %v906
    %v934 = vpack.c.b16 %v909, %v908
    %v935 = vpack.c.b16 %v911, %v910
    %v936 = vpack.c.b16 %v913, %v912
    %v937 = vpack.c.b16 %v915, %v914
    %v938 = vpack.c.b16 %v917, %v916
    %v939 = vpack.c.b16 %v919, %v918
    %v940 = vpack.c.b16 %v921, %v920
    %v941 = vpack.c.b16 %v923, %v922
    %v942 = vpack.c.b16 %v925, %v924
    %v943 = vpack.c.b16 %v927, %v926
    %960 = vmatprep.subr.bf16.mxu0 0
    %961 = vmatpush1.bf16.msra.mxu0 %v928
    %962 = vmatprep.subr.bf16.mxu0 0
    %963 = vmatpush1.bf16.msra.mxu0 %v929
    %964 = vmatprep.subr.bf16.mxu0 0
    %965 = vmatpush1.bf16.msra.mxu0 %v930
    %966 = vmatprep.subr.bf16.mxu0 0
    %967 = vmatpush1.bf16.msra.mxu0 %v931
    %968 = vmatprep.subr.bf16.mxu0 0
    %969 = vmatpush1.bf16.msra.mxu0 %v932
    %970 = vmatprep.subr.bf16.mxu0 0
    %971 = vmatpush1.bf16.msra.mxu0 %v933
    %972 = vmatprep.subr.bf16.mxu0 0
    %973 = vmatpush1.bf16.msra.mxu0 %v934
    %974 = vmatprep.subr.bf16.mxu0 0
    %975 = vmatpush1.bf16.msra.mxu0 %v935
    %976 = vmatprep.subr.bf16.mxu0 0
    %977 = vmatpush1.bf16.msra.mxu0 %v936
    %978 = vmatprep.subr.bf16.mxu0 0
    %979 = vmatpush1.bf16.msra.mxu0 %v937
    %980 = vmatprep.subr.bf16.mxu0 0
    %981 = vmatpush1.bf16.msra.mxu0 %v938
    %982 = vmatprep.subr.bf16.mxu0 0
    %983 = vmatpush1.bf16.msra.mxu0 %v939
    %984 = vmatprep.subr.bf16.mxu0 0
    %985 = vmatpush1.bf16.msra.mxu0 %v940
    %986 = vmatprep.subr.bf16.mxu0 0
    %987 = vmatpush1.bf16.msra.mxu0 %v941
    %988 = vmatprep.subr.bf16.mxu0 0
    %989 = vmatpush1.bf16.msra.mxu0 %v942
    %990 = vmatprep.subr.bf16.mxu0 0
    %991 = vmatpush1.bf16.msra.mxu0 %v943
    %992 = vmatprep.mubr.bf16.mxu0 %v824
    %993 = vmatmul.mubr.bf16.gmra.mrb[0].mxu0 %v823
    %v994 = vpop.f32.mrb[0].mxu0
    %v995 = vadd.f32 %v862, %v994
    %v996 = vpop.f32.mrb[0].mxu0
    %v997 = vpop.f32.mrb[0].mxu0
    %v998 = vpop.f32.mrb[0].mxu0
    %999 = vdwg.mxu0
    %v1000 = vtanh.pop %v995
    %v1001 = vmax.f32 %v1000, 0.0
    %1002 = vst [vmem:[#allocation14] sm:$0xff] %v1001
    // Predicated region
    $region74: #{tpu_custom_call.1} parent=1 // pred_check
      _
    $region75: #{tpu_custom_call.1} parent=1 // pred_check_branch
      %1004 = sbr.rel (0) target = $region77
    $region76: #{tpu_custom_call.1} parent=1 // pred_region
      %s1006 = ssub.s32 128, 128
      %1007 = vsyncadd [#allocation4], %s1006
      %s1009 = sshll.u32 [#allocation14], 4
      %s1010 = int_to_ptr.vmem [resolvable:$true] %s1009
      %1012 = dma.vmem_to_hbm [thread:$0]  %s1010, 128, %s11, [#allocation4]
    $region77: #{tpu_custom_call.1} parent=1 // pred_fallthru
      _
    // Predicated region
    $region78: #{tpu_custom_call.1} parent=1 // pred_check
      _
    $region79: #{tpu_custom_call.1} parent=1 // pred_check_branch
      %1014 = sbr.rel (0) target = $region81
    $region80: #{tpu_custom_call.1} parent=1 // pred_region
      %1015 = dma.done [#allocation4], 128
    $region81: #{tpu_custom_call.1} parent=1 // pred_fallthru
      _
    %1016 = vsyncpa [#allocation3], 1
    %1017 = vsyncpa [#allocation6], 1
    %1018 = vsyncpa [#allocation9], 1
    %1019 = vsyncpa [#allocation12], 1
    %1020 = vsyncpa [#allocation4], 1

</llo_original>
